<compile_context>
chip_gen: v7x
topology: tpu7x:2x2x1
jax: 0.10.0
libtpu: 0.0.40
codegen_flags: <defaults>
</compile_context>

<pallas_src>
import jax
import jax.numpy as jnp
from jax import lax
from jax.experimental import pallas as pl
from jax.experimental.pallas import tpu as pltpu


_INV_SQRT2 = 0.7071067811865476


def _round_up(x, m):
    return ((x + m - 1) // m) * m


def _gelu_exact_f32(h):
    # Exact GELU: 0.5*h*(1+erf(h/sqrt(2))) -- matches torch nn.GELU().
    return 0.5 * h * (1.0 + lax.erf(h * jnp.float32(_INV_SQRT2)))


def _ffn_resident_kernel(x_ref, w1_ref, b1_ref, w2_ref, b2_ref, o_ref):
    # Grid: (row tiles,) -- weights fully resident (constant index_map).
    # x_ref : (tm, dim)      bf16
    # w1_ref: (dim, hidden)  bf16   b1_ref: (1, hidden) f32
    # w2_ref: (hidden, dim)  bf16   b2_ref: (1, dim)    f32
    # o_ref : (tm, dim)
    h = jnp.dot(x_ref[...], w1_ref[...], preferred_element_type=jnp.float32)
    h = _gelu_exact_f32(h + b1_ref[...])
    # Dropout(p=0.0) -> identity (elided).
    o = jnp.dot(h.astype(w2_ref.dtype), w2_ref[...],
                preferred_element_type=jnp.float32)
    o_ref[...] = (o + b2_ref[...]).astype(o_ref.dtype)


def _ffn_tiled_kernel(x_ref, w1_ref, b1_ref, w2_ref, b2_ref, o_ref, acc_ref):
    # Grid: (row tiles [parallel], hidden tiles [arbitrary: Linear2 reduction])
    # acc_ref: (tm, dim) f32 VMEM accumulator, init/finalize via pl.when.
    j = pl.program_id(1)

    @pl.when(j == 0)
    def _():
        acc_ref[...] = jnp.zeros_like(acc_ref)

    h = jnp.dot(x_ref[...], w1_ref[...], preferred_element_type=jnp.float32)
    h = _gelu_exact_f32(h + b1_ref[...])
    # Dropout(p=0.0) -> identity (elided).
    acc_ref[...] += jnp.dot(h.astype(w2_ref.dtype), w2_ref[...],
                            preferred_element_type=jnp.float32)

    @pl.when(j == pl.num_programs(1) - 1)
    def _():
        o_ref[...] = (acc_ref[...] + b2_ref[...]).astype(o_ref.dtype)


def _pick_hidden_tile(hidden, th_max):
    """Largest divisor of `hidden` that is a multiple of 128 and <= th_max.

    Falls back to the largest plain divisor <= th_max (never to hidden itself
    unless hidden <= th_max), so the f32 intermediate / weight tiles stay
    bounded.
    """
    if hidden <= th_max:
        return hidden
    best_any = 1
    for d in range(th_max, 0, -1):
        if hidden % d == 0:
            if d % 128 == 0:
                return d
            if best_any == 1:
                best_any = d
    return best_any


def feed_forward(x, w1, b1, w2, b2, *, tm=512, th=1024,
                 mxu_dtype=jnp.bfloat16, out_dtype=None):
    """ViT FeedForward: Linear(dim->hidden) -> GELU -> Linear(hidden->dim).

    x: (batch, seq, dim). Returns (batch, seq, dim) in `out_dtype`
    (defaults to x.dtype). MXU operands use `mxu_dtype`; accumulation is f32.
    """
    batch, seq, dim = x.shape
    hidden = w1.shape[1]
    if out_dtype is None:
        out_dtype = x.dtype
    M = batch * seq
    isz = jnp.dtype(mxu_dtype).itemsize
    osz = jnp.dtype(out_dtype).itemsize

    # ---- row tile selection -------------------------------------------------
    # Clamp to M for tiny inputs, round to a multiple of 16 (bf16 sublane
    # packing). Keep >=2 row tiles when there is enough work so v7x's two
    # TensorCores are both fed on the "parallel" axis, without dropping the
    # tile below 256 rows (arithmetic-intensity floor).
    tm = max(16, min(tm, _round_up(M, 16)))
    tm = _round_up(tm, 16)
    if M >= 512 and -(-M // tm) < 2:
        tm = max(256, _round_up(-(-M // 2), 128))
    M_pad = _round_up(M, tm)
    n_row = M_pad // tm

    # ---- generation-aware VMEM budget --------------------------------------
    vmem_cap = 64 * 1024 * 1024          # conservative fallback (v7x-sized)
    try:
        info = pltpu.get_tpu_info()
        vmem_cap = int(getattr(info, "vmem_capacity_bytes", vmem_cap))
    except Exception:
        pass
    vmem_budget = int(0.75 * vmem_cap)   # ~48 MiB on v7x, ~96 MiB on v5e/v6e

    # ---- mode selection: weight-resident vs hidden-tiled --------------------
    w_bytes = (dim * hidden + hidden * dim) * isz
    resident_est = (
        2 * w_bytes                        # W1 + W2 (allow double-buffering)
        + 2 * tm * dim * isz               # x tile (double-buffered)
        + 2 * tm * dim * osz               # out tile (double-buffered)
        + 2 * (hidden + dim) * 4           # biases
        + tm * hidden * (4 + isz)          # f32 intermediate + bf16 cast
        + tm * dim * 4                     # f32 result pre-cast
    )
    use_resident = resident_est <= vmem_budget

    # ---- prepare operands (single cast in the wrapper) ----------------------
    x2d = x.reshape(M, dim)
    if M_pad != M:
        x2d = jnp.pad(x2d, ((0, M_pad - M), (0, 0)))
    x2d = x2d.astype(mxu_dtype)
    w1c = w1.astype(mxu_dtype)
    w2c = w2.astype(mxu_dtype)
    b1_2d = b1.reshape(1, hidden).astype(jnp.float32)
    b2_2d = b2.reshape(1, dim).astype(jnp.float32)

    if use_resident:
        grid = (n_row,)
        kernel = _ffn_resident_kernel
        in_specs = [
            pl.BlockSpec((tm, dim), lambda i: (i, 0)),        # x rows
            pl.BlockSpec((dim, hidden), lambda i: (0, 0)),    # W1 resident
            pl.BlockSpec((1, hidden), lambda i: (0, 0)),      # b1
            pl.BlockSpec((hidden, dim), lambda i: (0, 0)),    # W2 resident
            pl.BlockSpec((1, dim), lambda i: (0, 0)),         # b2
        ]
        out_specs = pl.BlockSpec((tm, dim), lambda i: (i, 0))
        scratch_shapes = []
        dim_sem = ("parallel",)
        vmem_est = resident_est
        # Weights read exactly once.
        bytes_accessed = (x2d.size * isz + w_bytes + (hidden + dim) * 4
                          + M_pad * dim * osz)
    else:
        th = _pick_hidden_tile(hidden, min(th, hidden))
        n_h = hidden // th
        grid = (n_row, n_h)
        kernel = _ffn_tiled_kernel
        in_specs = [
            pl.BlockSpec((tm, dim), lambda i, j: (i, 0)),     # x rows
            pl.BlockSpec((dim, th), lambda i, j: (0, j)),     # W1 hidden tile
            pl.BlockSpec((1, th), lambda i, j: (0, j)),       # b1 hidden tile
            pl.BlockSpec((th, dim), lambda i, j: (j, 0)),     # W2 hidden tile
            pl.BlockSpec((1, dim), lambda i, j: (0, 0)),      # b2
        ]
        out_specs = pl.BlockSpec((tm, dim), lambda i, j: (i, 0))
        scratch_shapes = [pltpu.VMEM((tm, dim), jnp.float32)]
        dim_sem = ("parallel", "arbitrary")
        vmem_est = (2 * (tm * dim * isz + dim * th * isz + th * dim * isz
                         + (th + dim) * 4 + tm * dim * osz)
                    + tm * dim * 4                 # f32 accumulator scratch
                    + tm * th * (4 + isz))         # f32 intermediate + cast
        # Weights re-streamed once per row tile in this layout.
        bytes_accessed = (x2d.size * isz
                          + n_row * (w_bytes + (hidden + dim) * 4)
                          + M_pad * dim * osz)

    vmem_limit = int(min(vmem_budget, max(2 * vmem_est, 32 * 1024 * 1024)))

    cost = pl.CostEstimate(
        flops=4 * M_pad * dim * hidden,
        transcendentals=M_pad * hidden,
        bytes_accessed=int(bytes_accessed),
    )

    # TODO(synk): if profiling shows exposed weight DMA in the tiled path, add
    # pipeline_mode=pl.Buffered(3) on the W1/W2 BlockSpecs only.
    out2d = pl.pallas_call(
        kernel,
        out_shape=jax.ShapeDtypeStruct((M_pad, dim), out_dtype),
        grid_spec=pltpu.PrefetchScalarGridSpec(
            num_scalar_prefetch=0,
            grid=grid,
            in_specs=in_specs,
            out_specs=out_specs,
            scratch_shapes=scratch_shapes,
        ),
        compiler_params=pltpu.CompilerParams(
            dimension_semantics=dim_sem,
            vmem_limit_bytes=vmem_limit,
        ),
        cost_estimate=cost,
    )(x2d, w1c, b1_2d, w2c, b2_2d)

    return out2d[:M].reshape(batch, seq, dim)


def _ref_feed_forward(x, w1, b1, w2, b2, mxu_dtype=jnp.bfloat16):
    # Reference applies the same bf16 MXU-operand casts with f32 accumulation.
    xd = x.astype(mxu_dtype)
    h = jnp.einsum("bsd,dh->bsh", xd, w1.astype(mxu_dtype),
                   preferred_element_type=jnp.float32) + b1.astype(jnp.float32)
    h = 0.5 * h * (1.0 + lax.erf(h * jnp.float32(_INV_SQRT2)))
    o = jnp.einsum("bsh,hd->bsd", h.astype(mxu_dtype), w2.astype(mxu_dtype),
                   preferred_element_type=jnp.float32) + b2.astype(jnp.float32)
    return o.astype(x.dtype)


if __name__ == "__main__":
    batch, seq, dim, hidden = 2, 8, 32, 64

    key = jax.random.PRNGKey(0)
    kx, kw1, kb1, kw2, kb2 = jax.random.split(key, 5)

    x = jax.random.normal(kx, (batch, seq, dim), dtype=jnp.float32)
    # Deterministic synthetic params (nn.Linear-like scales).
    w1 = jax.random.normal(kw1, (dim, hidden), dtype=jnp.float32) * (1.0 / dim ** 0.5)
    b1 = jax.random.normal(kb1, (hidden,), dtype=jnp.float32) * 0.01
    w2 = jax.random.normal(kw2, (hidden, dim), dtype=jnp.float32) * (1.0 / hidden ** 0.5)
    b2 = jax.random.normal(kb2, (dim,), dtype=jnp.float32) * 0.01

    out = feed_forward(x, w1, b1, w2, b2)
    out = jax.block_until_ready(out)

    ref = _ref_feed_forward(x, w1, b1, w2, b2)
    assert out.shape == (batch, seq, dim)
    # bf16 MXU operands with f32 accumulation -> compare against the
    # identically-cast reference with a tolerance covering accumulation order.
    assert jnp.allclose(out, ref, atol=1e-2, rtol=1e-2), "mismatch vs reference"

    print("KERNEL_OK")
</pallas_src>

<mosaic_0001>
module attributes {stable_mosaic.version = 11 : i64} {
  func.func @_ffn_resident_kernel(%arg0: i32, %arg1: memref<16x32xbf16, #tpu.memory_space<vmem>>, %arg2: memref<32x64xbf16, #tpu.memory_space<vmem>>, %arg3: memref<1x64xf32, #tpu.memory_space<vmem>>, %arg4: memref<64x32xbf16, #tpu.memory_space<vmem>>, %arg5: memref<1x32xf32, #tpu.memory_space<vmem>>, %arg6: memref<16x32xf32, #tpu.memory_space<vmem>>) attributes {dimension_semantics = [#tpu.dimension_semantics<parallel>], iteration_bounds = array<i64: 1>, scalar_prefetch = 0 : i64, scratch_operands = 0 : i64, tpu.core_type = #tpu.core_type<tc>, window_params = [{transform_indices = @transform_0, window_bounds = array<i64: 16, 32>}, {pipeline_mode = #tpu.pipeline_mode<synchronous>, transform_indices = @transform_1, window_bounds = array<i64: 32, 64>}, {pipeline_mode = #tpu.pipeline_mode<synchronous>, transform_indices = @transform_2, window_bounds = array<i64: 1, 64>}, {pipeline_mode = #tpu.pipeline_mode<synchronous>, transform_indices = @transform_3, window_bounds = array<i64: 64, 32>}, {pipeline_mode = #tpu.pipeline_mode<synchronous>, transform_indices = @transform_4, window_bounds = array<i64: 1, 32>}, {transform_indices = @transform_5, window_bounds = array<i64: 16, 32>}]} {
    %c0 = arith.constant 0 : index
    %c0_0 = arith.constant 0 : index
    %0 = vector.load %arg1[%c0, %c0_0] : memref<16x32xbf16, #tpu.memory_space<vmem>>, vector<16x32xbf16>
    %c0_1 = arith.constant 0 : index
    %c0_2 = arith.constant 0 : index
    %1 = vector.load %arg2[%c0_1, %c0_2] : memref<32x64xbf16, #tpu.memory_space<vmem>>, vector<32x64xbf16>
    %cst = arith.constant dense<0.000000e+00> : vector<16x64xf32>
    %2 = tpu.matmul %0, %1, %cst {dimension_numbers = #tpu.dot_dimension_numbers<[1], [0], [0], [1], [0, 0, 1, 1], [], []>} : vector<16x32xbf16>, vector<32x64xbf16>, vector<16x64xf32> -> vector<16x64xf32>
    %c0_3 = arith.constant 0 : index
    %c0_4 = arith.constant 0 : index
    %3 = vector.load %arg3[%c0_3, %c0_4] : memref<1x64xf32, #tpu.memory_space<vmem>>, vector<1x64xf32>
    %4 = vector.broadcast %3 : vector<1x64xf32> to vector<16x64xf32>
    %5 = arith.addf %2, %4 : vector<16x64xf32>
    %cst_5 = arith.constant 5.000000e-01 : f32
    %6 = vector.broadcast %cst_5 : f32 to vector<16x64xf32>
    %7 = arith.mulf %6, %5 : vector<16x64xf32>
    %cst_6 = arith.constant 0.707106769 : f32
    %8 = vector.broadcast %cst_6 : f32 to vector<16x64xf32>
    %9 = arith.mulf %5, %8 : vector<16x64xf32>
    %10 = math.erf %9 : vector<16x64xf32>
    %cst_7 = arith.constant 1.000000e+00 : f32
    %11 = vector.broadcast %cst_7 : f32 to vector<16x64xf32>
    %12 = arith.addf %11, %10 : vector<16x64xf32>
    %13 = arith.mulf %7, %12 : vector<16x64xf32>
    %14 = arith.truncf %13 : vector<16x64xf32> to vector<16x64xbf16>
    %c0_8 = arith.constant 0 : index
    %c0_9 = arith.constant 0 : index
    %15 = vector.load %arg4[%c0_8, %c0_9] : memref<64x32xbf16, #tpu.memory_space<vmem>>, vector<64x32xbf16>
    %cst_10 = arith.constant dense<0.000000e+00> : vector<16x32xf32>
    %16 = tpu.matmul %14, %15, %cst_10 {dimension_numbers = #tpu.dot_dimension_numbers<[1], [0], [0], [1], [0, 0, 1, 1], [], []>} : vector<16x64xbf16>, vector<64x32xbf16>, vector<16x32xf32> -> vector<16x32xf32>
    %c0_11 = arith.constant 0 : index
    %c0_12 = arith.constant 0 : index
    %17 = vector.load %arg5[%c0_11, %c0_12] : memref<1x32xf32, #tpu.memory_space<vmem>>, vector<1x32xf32>
    %18 = vector.broadcast %17 : vector<1x32xf32> to vector<16x32xf32>
    %19 = arith.addf %16, %18 : vector<16x32xf32>
    %c0_13 = arith.constant 0 : index
    %c0_14 = arith.constant 0 : index
    %20 = vector.load %arg6[%c0_13, %c0_14] : memref<16x32xf32, #tpu.memory_space<vmem>>, vector<16x32xf32>
    tpu.vector_store %arg6[%c0_13, %c0_14], %19 {strides = array<i32>} : memref<16x32xf32, #tpu.memory_space<vmem>>, vector<16x32xf32>,
    return
  }
  func.func @transform_0(%arg0: i32) -> (i32, i32) {
    %c0_i32 = arith.constant 0 : i32
    %c0_i32_0 = arith.constant 0 : i32
    return %arg0, %c0_i32 : i32, i32
  }
  func.func @transform_1(%arg0: i32) -> (i32, i32) {
    %c0_i32 = arith.constant 0 : i32
    %c0_i32_0 = arith.constant 0 : i32
    %c0_i32_1 = arith.constant 0 : i32
    return %c0_i32, %c0_i32_0 : i32, i32
  }
  func.func @transform_2(%arg0: i32) -> (i32, i32) {
    %c0_i32 = arith.constant 0 : i32
    %c0_i32_0 = arith.constant 0 : i32
    %c0_i32_1 = arith.constant 0 : i32
    return %c0_i32, %c0_i32_0 : i32, i32
  }
  func.func @transform_3(%arg0: i32) -> (i32, i32) {
    %c0_i32 = arith.constant 0 : i32
    %c0_i32_0 = arith.constant 0 : i32
    %c0_i32_1 = arith.constant 0 : i32
    return %c0_i32, %c0_i32_0 : i32, i32
  }
  func.func @transform_4(%arg0: i32) -> (i32, i32) {
    %c0_i32 = arith.constant 0 : i32
    %c0_i32_0 = arith.constant 0 : i32
    %c0_i32_1 = arith.constant 0 : i32
    return %c0_i32, %c0_i32_0 : i32, i32
  }
  func.func @transform_5(%arg0: i32) -> (i32, i32) {
    %c0_i32 = arith.constant 0 : i32
    %c0_i32_0 = arith.constant 0 : i32
    return %arg0, %c0_i32 : i32, i32
  }
}

</mosaic_0001>

<llo_original>
// kernel: tpu_custom_call.1
$region0: #{tpu_custom_call.1}
  #allocation0 [shape = 'u32[]', space=smem, size = 0x4, offset = 0x4, fixed_abs, tag = 'smem constant byte address 0x4 - core index']
  #allocation1 [shape = 'u32[144,128]{1,0:T(1,128)}', space=vmem, size = 0x12000, scoped, tag = 'internal scratch']
  %s0 = inlined_call_operand.vmem [shape: bf16[16,32], index: 0, kind: input, shape index: {}]
  %s1 = inlined_call_operand.vmem [shape: bf16[32,64], index: 1, kind: input, shape index: {}]
  %s2 = inlined_call_operand.vmem [shape: f32[1,64], index: 2, kind: input, shape index: {}]
  %s3 = inlined_call_operand.vmem [shape: bf16[64,32], index: 3, kind: input, shape index: {}]
  %s4 = inlined_call_operand.vmem [shape: f32[1,32], index: 4, kind: input, shape index: {}]
  %s5 = inlined_call_operand.hbm [shape: f32[16,32], index: 5, kind: output, shape index: {}]
  %s6 = sld [smem:[#allocation0]]
  $region30: #{tpu_custom_call.1} parent=0
    _
  %s8 = ssub.s32 1, %s6
  %s9 = scalar_select 0, %s8, %s6
  $region1: #{tpu_custom_call.1} parent=0
    #allocation2 [shape = 'u8[8192]{0}', space=vmem, size = 0x2000, scoped, tag = 'output window, operand 0, single buffered']
    #allocation3 [shape = 's32[1]{0}', space=sflag, size = 0x4, scoped, tag = 'scoped memory for tpu_custom_call.1']
    %10 = vsyncpa [#allocation3], 0
    // Predicated region
    $region2: #{tpu_custom_call.1} parent=1 // pred_check
      _
    $region3: #{tpu_custom_call.1} parent=1 // pred_check_branch
      %12 = sbr.rel (0) target = $region5
    $region4: #{tpu_custom_call.1} parent=1 // pred_region
      _
    $region5: #{tpu_custom_call.1} parent=1 // pred_fallthru
      _
    // Predicated region
    $region6: #{tpu_custom_call.1} parent=1 // pred_check
      _
    $region7: #{tpu_custom_call.1} parent=1 // pred_check_branch
      %14 = sbr.rel (0) target = $region9
    $region8: #{tpu_custom_call.1} parent=1 // pred_region
      _
    $region9: #{tpu_custom_call.1} parent=1 // pred_fallthru
      _
    // Predicated region
    $region10: #{tpu_custom_call.1} parent=1 // pred_check
      _
    $region11: #{tpu_custom_call.1} parent=1 // pred_check_branch
      %16 = sbr.rel (0) target = $region13
    $region12: #{tpu_custom_call.1} parent=1 // pred_region
      _
    $region13: #{tpu_custom_call.1} parent=1 // pred_fallthru
      _
    // Predicated region
    $region14: #{tpu_custom_call.1} parent=1 // pred_check
      _
    $region15: #{tpu_custom_call.1} parent=1 // pred_check_branch
      %18 = sbr.rel (0) target = $region17
    $region16: #{tpu_custom_call.1} parent=1 // pred_region
      _
    $region17: #{tpu_custom_call.1} parent=1 // pred_fallthru
      _
    // Predicated region
    $region18: #{tpu_custom_call.1} parent=1 // pred_check
      _
    $region19: #{tpu_custom_call.1} parent=1 // pred_check_branch
      %20 = sbr.rel (0) target = $region21
    $region20: #{tpu_custom_call.1} parent=1 // pred_region
      _
    $region21: #{tpu_custom_call.1} parent=1 // pred_fallthru
      _
    %v22 = vld [vmem:[%s0] sm:$0xf]
    %v23 = vld [vmem:[%s0 + $0x4] sm:$0xf]
    %v24 = vld [vmem:[%s1] sm:$0xf]
    %v25 = vld [vmem:[%s1 + $0x4] sm:$0xf]
    %v26 = vld [vmem:[%s1 + $0x8] sm:$0xf]
    %v27 = vld [vmem:[%s1 + $0xc] sm:$0xf]
    %v28 = vld [vmem:[%s2] sm:$0x1]
    %v30 = vlaneseq
    %v31 = vshrl.u32 %v30, 7
    %v32 = vsub.s32 0, %v31
    %v33 = vrot.slane %v28, %v32
    %v37 = vunpack.c.l.b16 %v22
    %v38 = vunpack.c.l.b16 %v23
    %v39 = vpack.c.b16 %v38, %v37
    %v44 = vunpack.c.l.b16 %v24
    %v45 = vunpack.c.l.b16 %v25
    %v46 = vunpack.c.l.b16 %v26
    %v47 = vunpack.c.l.b16 %v27
    %v48 = vpack.c.b16 %v45, %v44
    %v49 = vpack.c.b16 %v47, %v46
    %vm52 = vcmask 261120
    %v54 = vsel %vm52, %v39, 0
    %56 = vmatprep.subr.bf16.mxu0 0
    %57 = vmatpush1.bf16.msra.mxu0 %v48
    %58 = vmatprep.subr.bf16.mxu0 0
    %59 = vmatpush1.bf16.msra.mxu0 %v49
    %60 = vmatprep.subr.bf16.mxu0 0
    %61 = vmatpush1.bf16.msra.mxu0 0
    %62 = vmatprep.subr.bf16.mxu0 0
    %63 = vmatpush1.bf16.msra.mxu0 0
    %64 = vmatprep.subr.bf16.mxu0 0
    %65 = vmatpush1.bf16.msra.mxu0 0
    %66 = vmatprep.subr.bf16.mxu0 0
    %67 = vmatpush1.bf16.msra.mxu0 0
    %68 = vmatprep.subr.bf16.mxu0 0
    %69 = vmatpush1.bf16.msra.mxu0 0
    %70 = vmatprep.subr.bf16.mxu0 0
    %71 = vmatpush1.bf16.msra.mxu0 0
    %72 = vmatprep.subr.bf16.mxu0 0
    %73 = vmatpush1.bf16.msra.mxu0 0
    %74 = vmatprep.subr.bf16.mxu0 0
    %75 = vmatpush1.bf16.msra.mxu0 0
    %76 = vmatprep.subr.bf16.mxu0 0
    %77 = vmatpush1.bf16.msra.mxu0 0
    %78 = vmatprep.subr.bf16.mxu0 0
    %79 = vmatpush1.bf16.msra.mxu0 0
    %80 = vmatprep.subr.bf16.mxu0 0
    %81 = vmatpush1.bf16.msra.mxu0 0
    %82 = vmatprep.subr.bf16.mxu0 0
    %83 = vmatpush1.bf16.msra.mxu0 0
    %84 = vmatprep.subr.bf16.mxu0 0
    %85 = vmatpush1.bf16.msra.mxu0 0
    %86 = vmatprep.subr.bf16.mxu0 0
    %87 = vmatpush1.bf16.msra.mxu0 0
    %88 = vmatprep.mubr.bf16.mxu0 0
    %89 = vmatmul.mubr.bf16.gmra.mrb[0].mxu0 %v54
    %v90 = vpop.f32.mrb[0].mxu0
    %v91 = vadd.f32 %v33, %v90
    %v92 = vpop.f32.mrb[0].mxu0
    %v93 = vpop.f32.mrb[0].mxu0
    %v94 = vadd.f32 %v33, %v93
    %v95 = vpop.f32.mrb[0].mxu0
    %96 = vdwg.mxu0
    %v97 = vmul.f32 %v91, 0.5
    %v98 = vmul.f32 %v94, 0.5
    %v99 = vmul.f32 %v91, 0.70710677
    %v100 = vmul.f32 %v94, 0.70710677
    %v101 = verf.f32.pop %v99
    %v102 = verf.f32.pop %v100
    %v103 = vadd.f32 %v101, 1.0
    %v104 = vadd.f32 %v102, 1.0
    %v105 = vmul.f32 %v97, %v103
    %v106 = vmul.f32 %v98, %v104
    %v107 = vpack.c.bf16 %v106, %v105
    %v108 = vld [vmem:[%s3] sm:$0xf]
    %v109 = vld [vmem:[%s3 + $0x4] sm:$0xf]
    %v110 = vld [vmem:[%s3 + $0x8] sm:$0xf]
    %v111 = vld [vmem:[%s3 + $0xc] sm:$0xf]
    %v112 = vld [vmem:[%s3 + $0x10] sm:$0xf]
    %v113 = vld [vmem:[%s3 + $0x14] sm:$0xf]
    %v114 = vld [vmem:[%s3 + $0x18] sm:$0xf]
    %v115 = vld [vmem:[%s3 + $0x1c] sm:$0xf]
    %v116 = vld [vmem:[%s4] sm:$0x1]
    %v118 = vlaneseq
    %v119 = vshrl.u32 %v118, 7
    %v120 = vsub.s32 0, %v119
    %v121 = vrot.slane %v116, %v120
    %v131 = vunpack.c.l.b16 %v108
    %v132 = vunpack.c.l.b16 %v109
    %v133 = vunpack.c.l.b16 %v110
    %v134 = vunpack.c.l.b16 %v111
    %v135 = vunpack.c.l.b16 %v112
    %v136 = vunpack.c.l.b16 %v113
    %v137 = vunpack.c.l.b16 %v114
    %v138 = vunpack.c.l.b16 %v115
    %v139 = vpack.c.b16 %v132, %v131
    %v140 = vpack.c.b16 %v134, %v133
    %v141 = vpack.c.b16 %v136, %v135
    %v142 = vpack.c.b16 %v138, %v137
    %vm147 = vcmask 523264
    %v149 = vsel %vm147, %v107, 0
    %151 = vmatprep.subr.bf16.mxu0 0
    %152 = vmatpush1.bf16.msra.mxu0 %v139
    %153 = vmatprep.subr.bf16.mxu0 0
    %154 = vmatpush1.bf16.msra.mxu0 %v140
    %155 = vmatprep.subr.bf16.mxu0 0
    %156 = vmatpush1.bf16.msra.mxu0 %v141
    %157 = vmatprep.subr.bf16.mxu0 0
    %158 = vmatpush1.bf16.msra.mxu0 %v142
    %159 = vmatprep.subr.bf16.mxu0 0
    %160 = vmatpush1.bf16.msra.mxu0 0
    %161 = vmatprep.subr.bf16.mxu0 0
    %162 = vmatpush1.bf16.msra.mxu0 0
    %163 = vmatprep.subr.bf16.mxu0 0
    %164 = vmatpush1.bf16.msra.mxu0 0
    %165 = vmatprep.subr.bf16.mxu0 0
    %166 = vmatpush1.bf16.msra.mxu0 0
    %167 = vmatprep.subr.bf16.mxu0 0
    %168 = vmatpush1.bf16.msra.mxu0 0
    %169 = vmatprep.subr.bf16.mxu0 0
    %170 = vmatpush1.bf16.msra.mxu0 0
    %171 = vmatprep.subr.bf16.mxu0 0
    %172 = vmatpush1.bf16.msra.mxu0 0
    %173 = vmatprep.subr.bf16.mxu0 0
    %174 = vmatpush1.bf16.msra.mxu0 0
    %175 = vmatprep.subr.bf16.mxu0 0
    %176 = vmatpush1.bf16.msra.mxu0 0
    %177 = vmatprep.subr.bf16.mxu0 0
    %178 = vmatpush1.bf16.msra.mxu0 0
    %179 = vmatprep.subr.bf16.mxu0 0
    %180 = vmatpush1.bf16.msra.mxu0 0
    %181 = vmatprep.subr.bf16.mxu0 0
    %182 = vmatpush1.bf16.msra.mxu0 0
    %183 = vmatprep.mubr.bf16.mxu0 0
    %184 = vmatmul.mubr.bf16.gmra.mrb[0].mxu0 %v149
    %v185 = vpop.f32.mrb[0].mxu0
    %v186 = vadd.f32 %v121, %v185
    %v187 = vpop.f32.mrb[0].mxu0
    %v188 = vpop.f32.mrb[0].mxu0
    %v189 = vadd.f32 %v121, %v188
    %v190 = vpop.f32.mrb[0].mxu0
    %191 = vdwg.mxu0
    %192 = vst.msk [vmem:[#allocation2] sm:$0xff] %vm52, %v186
    %193 = vst.msk [vmem:[#allocation2 + $0x8] sm:$0xff] %vm52, %v189
    // Predicated region
    $region22: #{tpu_custom_call.1} parent=1 // pred_check
      _
    $region23: #{tpu_custom_call.1} parent=1 // pred_check_branch
      %195 = sbr.rel (0) target = $region25
    $region24: #{tpu_custom_call.1} parent=1 // pred_region
      %s197 = ssub.s32 256, 256
      %198 = vsyncadd [#allocation3], %s197
      %s199 = sshll.u32 [#allocation2], 4
      %s200 = int_to_ptr.vmem [resolvable:$true] %s199
      %205 = dma.vmem_to_hbm [thread:$0]  %s200, 256, %s5, [#allocation3], 128, 128, 8
    $region25: #{tpu_custom_call.1} parent=1 // pred_fallthru
      _
    // Predicated region
    $region26: #{tpu_custom_call.1} parent=1 // pred_check
      _
    $region27: #{tpu_custom_call.1} parent=1 // pred_check_branch
      %207 = sbr.rel (0) target = $region29
    $region28: #{tpu_custom_call.1} parent=1 // pred_region
      %208 = dma.done [#allocation3], 256
    $region29: #{tpu_custom_call.1} parent=1 // pred_fallthru
      _
    %209 = vsyncpa [#allocation3], 1

</llo_original>
